<compile_context>
chip_gen: v7x
topology: tpu7x:2x2x1
jax: 0.10.0
libtpu: 0.0.40
codegen_flags: <defaults>
</compile_context>

<pallas_src>
import functools

import jax
import jax.numpy as jnp
from jax.experimental import pallas as pl
from jax.experimental.pallas import tpu as pltpu


# ---------------------------------------------------------------------------
# Small helpers
# ---------------------------------------------------------------------------
def _round_up(x, m):
    return (x + m - 1) // m * m


def _cdiv(a, b):
    return (a + b - 1) // b


def _sublane_align(dtype):
    """Minimum sublane multiple for the last-but-one dim: 8 (f32), 16 (bf16), 32 (int8)."""
    itemsize = jnp.dtype(dtype).itemsize
    return 8 * max(1, 4 // itemsize)


def _select_tile(dim, max_tile, align):
    """Tile <= max_tile, multiple of `align`, with balanced blocks so padding
    waste stays small (avoids ~2x blowup when `dim` is just over a tile
    multiple, e.g. B=264 with a 256 tile)."""
    d_aligned = _round_up(dim, align)
    n_blocks = _cdiv(d_aligned, max_tile)
    return _round_up(_cdiv(d_aligned, n_blocks), align)


def _select_n_tile(n, max_tile, min_tiles=1):
    """Like _select_tile for the output-column axis, but optionally splits it
    into >= min_tiles zero-padding-free tiles so both TensorCores have work
    on v7x when the batch axis is a single tile."""
    tn = _select_tile(n, max_tile, 128)
    n_aligned = _round_up(n, 128)
    if _cdiv(n_aligned, tn) >= min_tiles:
        return tn
    for g in range(min_tiles, min_tiles + 8):
        if n_aligned % g == 0 and (n_aligned // g) % 128 == 0:
            return n_aligned // g
    return tn


# ---------------------------------------------------------------------------
# Kernels
# ---------------------------------------------------------------------------
def _mlp_kernel_acc_out(x_ref, w_ref, b_ref, o_ref, *, compute_dtype):
    """f32 output: accumulate directly into the K-resident output tile.

    x_ref: (tb, tk) activations          w_ref: (tk, tn) weight, [in, out] layout
    b_ref: (1,  tn) bias (f32)           o_ref: (tb, tn) f32 output / accumulator
    """
    k = pl.program_id(2)

    @pl.when(k == 0)
    def _():
        o_ref[...] = jnp.zeros_like(o_ref)

    o_ref[...] += jnp.dot(x_ref[...].astype(compute_dtype), w_ref[...],
                          preferred_element_type=jnp.float32)

    @pl.when(k == pl.num_programs(2) - 1)
    def _():
        o_ref[...] = jnp.tanh(o_ref[...] + b_ref[...])


def _mlp_kernel_scratch(x_ref, w_ref, b_ref, o_ref, acc_ref, *, compute_dtype):
    """Low-precision output: f32 VMEM accumulator, single epilogue cast."""
    k = pl.program_id(2)

    @pl.when(k == 0)
    def _():
        acc_ref[...] = jnp.zeros_like(acc_ref)

    acc_ref[...] += jnp.dot(x_ref[...].astype(compute_dtype), w_ref[...],
                            preferred_element_type=jnp.float32)

    @pl.when(k == pl.num_programs(2) - 1)
    def _():
        o_ref[...] = jnp.tanh(acc_ref[...] + b_ref[...]).astype(o_ref.dtype)


# ---------------------------------------------------------------------------
# Weight preparation (one-time, model-load path)
# ---------------------------------------------------------------------------
def prepare_dense_params(weight, bias, *, tn_max=1024, tk_max=1024,
                         compute_dtype=jnp.bfloat16, min_n_tiles=1):
    """Transpose, pad and cast the PyTorch-layout nn.Linear weight ONCE.

    weight: [N_out, K_in] (PyTorch layout), bias: [N_out].
    Returns a dict holding W as [Kp, Np] in `compute_dtype`, bias as (1, Np)
    f32, and the chosen (tn, tk) tiles.
    """
    n, k = weight.shape
    tn = _select_n_tile(n, tn_max, min_n_tiles)
    tk = _select_tile(k, tk_max, 128)
    np_, kp = _round_up(n, tn), _round_up(k, tk)

    w_t = weight.T                                   # [K, N] — one-time layout change
    if kp != k or np_ != n:
        w_t = jnp.pad(w_t, ((0, kp - k), (0, np_ - n)))
    w_t = w_t.astype(compute_dtype)

    b_p = bias if np_ == n else jnp.pad(bias, (0, np_ - n))
    b_p = b_p.reshape(1, np_).astype(jnp.float32)

    return dict(weight=w_t, bias=b_p, n=n, k=k, tn=tn, tk=tk)


# ---------------------------------------------------------------------------
# Kernel launcher (hot path)
# ---------------------------------------------------------------------------
def mlp_layer_prepared(features, params, *, tb_max=512, w_buffers=2):
    """tanh(features @ W.T + b) using pre-prepared (transposed/padded/cast) params."""
    wp, bp = params["weight"], params["bias"]
    n, k = params["n"], params["k"]
    tn, tk = params["tn"], params["tk"]
    kp, np_ = wp.shape

    b_dim, k_in = features.shape
    assert k_in == k, (features.shape, (n, k))

    sub = _sublane_align(features.dtype)
    tb = _select_tile(b_dim, tb_max, sub)
    bp_dim = _round_up(b_dim, tb)

    x = features
    if bp_dim != b_dim or kp != k:            # zero K-cols contribute nothing
        x = jnp.pad(x, ((0, bp_dim - b_dim), (0, kp - k)))

    grid = (bp_dim // tb, np_ // tn, kp // tk)

    out_dtype = features.dtype
    x_it = jnp.dtype(x.dtype).itemsize
    w_it = jnp.dtype(wp.dtype).itemsize
    o_it = jnp.dtype(out_dtype).itemsize

    use_scratch = jnp.dtype(out_dtype) != jnp.dtype(jnp.float32)
    kernel_fn = _mlp_kernel_scratch if use_scratch else _mlp_kernel_acc_out
    kernel = functools.partial(kernel_fn, compute_dtype=wp.dtype)
    scratch = [pltpu.VMEM((tb, tn), jnp.float32)] if use_scratch else []

    # VMEM budget: double-buffered x / out, w_buffers-deep W stream, bias,
    # optional f32 scratch.  Defaults (~12-16 MiB) leave plenty of headroom
    # under v7x's 64 MiB physical / 32 MiB scoped-default VMEM.
    vmem_needed = (2 * tb * tk * x_it + w_buffers * tk * tn * w_it
                   + 2 * tb * tn * o_it + 2 * tn * 4
                   + (tb * tn * 4 if use_scratch else 0))
    vmem_limit = int(max(32 << 20, vmem_needed + (4 << 20)))

    w_spec_kwargs = {}
    if w_buffers != 2:
        # GEMV-like shapes (single batch tile) can leave the W DMA exposed;
        # deeper buffering on the weight stream hides it.
        w_spec_kwargs["pipeline_mode"] = pl.Buffered(w_buffers)

    cost = pl.CostEstimate(
        flops=2 * bp_dim * np_ * kp,
        transcendentals=bp_dim * np_,
        bytes_accessed=int(bp_dim * kp * x_it * grid[1]
                           + kp * np_ * w_it * grid[0]
                           + np_ * 4 + bp_dim * np_ * o_it))

    out_p = pl.pallas_call(
        kernel,
        out_shape=jax.ShapeDtypeStruct((bp_dim, np_), out_dtype),
        grid_spec=pltpu.PrefetchScalarGridSpec(
            num_scalar_prefetch=0,
            grid=grid,
            in_specs=[
                pl.BlockSpec((tb, tk), lambda i, j, kk: (i, kk)),                   # x
                pl.BlockSpec((tk, tn), lambda i, j, kk: (kk, j), **w_spec_kwargs),  # W [in,out]
                pl.BlockSpec((1, tn), lambda i, j, kk: (0, j)),                     # bias
            ],
            out_specs=pl.BlockSpec((tb, tn), lambda i, j, kk: (i, j)),
            scratch_shapes=scratch,
        ),
        compiler_params=pltpu.CompilerParams(
            dimension_semantics=("parallel", "parallel", "arbitrary"),
            vmem_limit_bytes=vmem_limit),
        cost_estimate=cost,
    )(x, wp, bp)

    return out_p[:b_dim, :n]


def mlp_layer(features, weight, bias, *, tb_max=512, tn_max=1024, tk_max=1024,
              compute_dtype=jnp.bfloat16, w_buffers=2):
    """Convenience wrapper: tanh(features @ weight.T + bias).

    NOTE: this re-prepares (transposes/pads/casts) the weight every call; for
    repeated use call prepare_dense_params() once at model-load time and call
    mlp_layer_prepared() in the hot path.
    """
    b_dim = features.shape[0]
    tb = _select_tile(b_dim, tb_max, _sublane_align(features.dtype))
    # If the batch axis is a single tile, split N so both v7x TCs get work.
    min_n_tiles = 2 if _round_up(b_dim, tb) // tb < 2 else 1
    params = prepare_dense_params(weight, bias, tn_max=tn_max, tk_max=tk_max,
                                  compute_dtype=compute_dtype,
                                  min_n_tiles=min_n_tiles)
    return mlp_layer_prepared(features, params, tb_max=tb_max, w_buffers=w_buffers)


# ---------------------------------------------------------------------------
# Self-test
# ---------------------------------------------------------------------------
if __name__ == "__main__":
    key = jax.random.PRNGKey(0)
    k_x, k_w, k_b = jax.random.split(key, 3)

    # BERT-pooler-like (CLS head) shapes: batch=8, hidden=32.
    B, H = 8, 32
    features = jax.random.normal(k_x, (B, H), dtype=jnp.float32)
    weight = jax.random.normal(k_w, (H, H), dtype=jnp.float32) / jnp.sqrt(H)
    bias = jax.random.normal(k_b, (H,), dtype=jnp.float32) * 0.1
    ref = jnp.tanh(features @ weight.T + bias)

    # 1) f32 MXU path: exact semantics.
    out_f32 = jax.block_until_ready(
        mlp_layer(features, weight, bias, compute_dtype=jnp.float32))
    assert out_f32.shape == (B, H)
    assert jnp.allclose(out_f32, ref, atol=1e-5, rtol=1e-5)

    # 2) Default bf16-operand MXU path (f32 accumulation).
    out_bf16 = jax.block_until_ready(mlp_layer(features, weight, bias))
    assert out_bf16.dtype == features.dtype
    assert jnp.allclose(out_bf16, ref, atol=2e-2, rtol=0)

    # 3) Multi-step (3x3x3) grid: exercises the K-axis accumulate-into-output
    #    path and the balanced tile selection, in exact f32.
    B2, H2 = 48, 384
    f2 = jax.random.normal(k_x, (B2, H2), dtype=jnp.float32)
    w2 = jax.random.normal(k_w, (H2, H2), dtype=jnp.float32) / jnp.sqrt(H2)
    b2 = jax.random.normal(k_b, (H2,), dtype=jnp.float32) * 0.1
    ref2 = jnp.tanh(f2 @ w2.T + b2)
    out2 = jax.block_until_ready(
        mlp_layer(f2, w2, b2, tb_max=16, tn_max=128, tk_max=128,
                  compute_dtype=jnp.float32))
    assert out2.shape == (B2, H2)
    assert jnp.allclose(out2, ref2, atol=1e-4, rtol=1e-4)

    # 4) Prepare-once / reuse path with bf16 weights and bf16 activations
    #    (exercises the scratch-accumulator kernel and (16,128) alignment).
    params = prepare_dense_params(w2, b2, min_n_tiles=2)
    out3 = jax.block_until_ready(
        mlp_layer_prepared(f2.astype(jnp.bfloat16), params))
    assert out3.dtype == jnp.bfloat16
    assert jnp.allclose(out3.astype(jnp.float32), ref2, atol=4e-2, rtol=0)

    print("KERNEL_OK")
</pallas_src>

<mosaic_0001>
module attributes {stable_mosaic.version = 11 : i64} {
  func.func @_mlp_kernel_acc_out(%arg0: i32, %arg1: i32, %arg2: i32, %arg3: memref<8x128xf32, #tpu.memory_space<vmem>>, %arg4: memref<128x128xf32, #tpu.memory_space<vmem>>, %arg5: memref<1x128xf32, #tpu.memory_space<vmem>>, %arg6: memref<8x128xf32, #tpu.memory_space<vmem>>) attributes {dimension_semantics = [#tpu.dimension_semantics<parallel>, #tpu.dimension_semantics<parallel>, #tpu.dimension_semantics<arbitrary>], iteration_bounds = array<i64: 1, 1, 1>, scalar_prefetch = 0 : i64, scratch_operands = 0 : i64, tpu.core_type = #tpu.core_type<tc>, window_params = [{transform_indices = @transform_0, window_bounds = array<i64: 8, 128>}, {transform_indices = @transform_1, window_bounds = array<i64: 128, 128>}, {transform_indices = @transform_2, window_bounds = array<i64: 1, 128>}, {transform_indices = @transform_3, window_bounds = array<i64: 8, 128>}]} {
    %c0_i32 = arith.constant 0 : i32
    %0 = arith.cmpi eq, %arg2, %c0_i32 : i32
    %1 = arith.extui %0 : i1 to i32
    %c0_i32_0 = arith.constant 0 : i32
    %2 = arith.cmpi ne, %1, %c0_i32_0 : i32
    scf.if %2 {
      %cst_10 = arith.constant 0.000000e+00 : f32
      %12 = vector.broadcast %cst_10 : f32 to vector<8x128xf32>
      %c0_11 = arith.constant 0 : index
      %c0_12 = arith.constant 0 : index
      %13 = vector.load %arg6[%c0_11, %c0_12] : memref<8x128xf32, #tpu.memory_space<vmem>>, vector<8x128xf32>
      tpu.vector_store %arg6[%c0_11, %c0_12], %12 {strides = array<i32>} : memref<8x128xf32, #tpu.memory_space<vmem>>, vector<8x128xf32>,
    } else {
    }
    %c0 = arith.constant 0 : index
    %c0_1 = arith.constant 0 : index
    %3 = vector.load %arg6[%c0, %c0_1] : memref<8x128xf32, #tpu.memory_space<vmem>>, vector<8x128xf32>
    %c0_2 = arith.constant 0 : index
    %c0_3 = arith.constant 0 : index
    %4 = vector.load %arg3[%c0_2, %c0_3] : memref<8x128xf32, #tpu.memory_space<vmem>>, vector<8x128xf32>
    %c0_4 = arith.constant 0 : index
    %c0_5 = arith.constant 0 : index
    %5 = vector.load %arg4[%c0_4, %c0_5] : memref<128x128xf32, #tpu.memory_space<vmem>>, vector<128x128xf32>
    %cst = arith.constant dense<0.000000e+00> : vector<8x128xf32>
    %6 = tpu.matmul %4, %5, %cst {dimension_numbers = #tpu.dot_dimension_numbers<[1], [0], [0], [1], [0, 0, 1, 1], [], []>} : vector<8x128xf32>, vector<128x128xf32>, vector<8x128xf32> -> vector<8x128xf32>
    %7 = arith.addf %3, %6 : vector<8x128xf32>
    %c0_6 = arith.constant 0 : index
    %c0_7 = arith.constant 0 : index
    %8 = vector.load %arg6[%c0_6, %c0_7] : memref<8x128xf32, #tpu.memory_space<vmem>>, vector<8x128xf32>
    tpu.vector_store %arg6[%c0_6, %c0_7], %7 {strides = array<i32>} : memref<8x128xf32, #tpu.memory_space<vmem>>, vector<8x128xf32>,
    %c0_i32_8 = arith.constant 0 : i32
    %9 = arith.cmpi eq, %arg2, %c0_i32_8 : i32
    %10 = arith.extui %9 : i1 to i32
    %c0_i32_9 = arith.constant 0 : i32
    %11 = arith.cmpi ne, %10, %c0_i32_9 : i32
    scf.if %11 {
      %c0_10 = arith.constant 0 : index
      %c0_11 = arith.constant 0 : index
      %12 = vector.load %arg6[%c0_10, %c0_11] : memref<8x128xf32, #tpu.memory_space<vmem>>, vector<8x128xf32>
      %c0_12 = arith.constant 0 : index
      %c0_13 = arith.constant 0 : index
      %13 = vector.load %arg5[%c0_12, %c0_13] : memref<1x128xf32, #tpu.memory_space<vmem>>, vector<1x128xf32>
      %14 = vector.broadcast %13 : vector<1x128xf32> to vector<8x128xf32>
      %15 = arith.addf %12, %14 : vector<8x128xf32>
      %16 = math.tanh %15 : vector<8x128xf32>
      %c0_14 = arith.constant 0 : index
      %c0_15 = arith.constant 0 : index
      %17 = vector.load %arg6[%c0_14, %c0_15] : memref<8x128xf32, #tpu.memory_space<vmem>>, vector<8x128xf32>
      tpu.vector_store %arg6[%c0_14, %c0_15], %16 {strides = array<i32>} : memref<8x128xf32, #tpu.memory_space<vmem>>, vector<8x128xf32>,
    } else {
    }
    return
  }
  func.func @transform_0(%arg0: i32, %arg1: i32, %arg2: i32) -> (i32, i32) {
    %c0_i32 = arith.constant 0 : i32
    return %arg0, %arg2 : i32, i32
  }
  func.func @transform_1(%arg0: i32, %arg1: i32, %arg2: i32) -> (i32, i32) {
    %c0_i32 = arith.constant 0 : i32
    return %arg2, %arg1 : i32, i32
  }
  func.func @transform_2(%arg0: i32, %arg1: i32, %arg2: i32) -> (i32, i32) {
    %c0_i32 = arith.constant 0 : i32
    %c0_i32_0 = arith.constant 0 : i32
    return %c0_i32, %arg1 : i32, i32
  }
  func.func @transform_3(%arg0: i32, %arg1: i32, %arg2: i32) -> (i32, i32) {
    %c0_i32 = arith.constant 0 : i32
    return %arg0, %arg1 : i32, i32
  }
}

</mosaic_0001>

<llo_original>
// kernel: tpu_custom_call.1
$region0: #{tpu_custom_call.1}
  #allocation0 [shape = 'u32[]', space=smem, size = 0x4, offset = 0x4, fixed_abs, tag = 'smem constant byte address 0x4 - core index']
  #allocation1 [shape = 'u32[144,128]{1,0:T(1,128)}', space=vmem, size = 0x12000, scoped, tag = 'internal scratch']
  %s0 = inlined_call_operand.hbm [shape: f32[8,128], index: 0, kind: input, shape index: {}]
  %s1 = inlined_call_operand.hbm [shape: f32[128,128], index: 1, kind: input, shape index: {}]
  %s2 = inlined_call_operand.vmem [shape: f32[1,128], index: 2, kind: input, shape index: {}]
  %s3 = inlined_call_operand.hbm [shape: f32[8,128], index: 3, kind: output, shape index: {}]
  %s4 = sld [smem:[#allocation0]]
  $region38: #{tpu_custom_call.1} parent=0
    _
  %s6 = ssub.s32 1, %s4
  %s7 = scalar_select 0, %s6, %s4
  $region1: #{tpu_custom_call.1} parent=0
    #allocation2 [shape = 'u8[4096]{0}', space=vmem, size = 0x1000, scoped, tag = 'input window, operand 0, single buffered']
    #allocation3 [shape = 's32[1]{0}', space=sflag, size = 0x4, scoped, tag = 'scoped memory for tpu_custom_call.1']
    #allocation4 [shape = 's32[1]{0}', space=sflag, size = 0x4, scoped, tag = 'scoped memory for tpu_custom_call.1']
    #allocation5 [shape = 'u8[65536]{0}', space=vmem, size = 0x10000, scoped, tag = 'input window, operand 1, single buffered']
    #allocation6 [shape = 's32[1]{0}', space=sflag, size = 0x4, scoped, tag = 'scoped memory for tpu_custom_call.1']
    #allocation7 [shape = 'u8[4096]{0}', space=vmem, size = 0x1000, scoped, tag = 'output window, operand 0, single buffered']
    %8 = vsyncpa [#allocation3], 0
    %9 = vsyncpa [#allocation6], 0
    %10 = vsyncpa [#allocation4], 0
    // Predicated region
    $region2: #{tpu_custom_call.1} parent=1 // pred_check
      _
    $region3: #{tpu_custom_call.1} parent=1 // pred_check_branch
      %12 = sbr.rel (0) target = $region5
    $region4: #{tpu_custom_call.1} parent=1 // pred_region
      %s14 = ssub.s32 128, 128
      %15 = vsyncadd [#allocation3], %s14
      %s17 = sshll.u32 [#allocation2], 4
      %s18 = int_to_ptr.vmem [resolvable:$true] %s17
      %20 = dma.hbm_to_vmem [thread:$0]  %s0, 128, %s18, [#allocation3]
    $region5: #{tpu_custom_call.1} parent=1 // pred_fallthru
      _
    // Predicated region
    $region6: #{tpu_custom_call.1} parent=1 // pred_check
      _
    $region7: #{tpu_custom_call.1} parent=1 // pred_check_branch
      %22 = sbr.rel (0) target = $region9
    $region8: #{tpu_custom_call.1} parent=1 // pred_region
      %s24 = ssub.s32 2048, 2048
      %25 = vsyncadd [#allocation6], %s24
      %s26 = sshll.u32 [#allocation5], 4
      %s27 = int_to_ptr.vmem [resolvable:$true] %s26
      %32 = dma.hbm_to_vmem [thread:$0]  %s1, 2048, %s27, [#allocation6], 128, 128, 8
    $region9: #{tpu_custom_call.1} parent=1 // pred_fallthru
      _
    // Predicated region
    $region10: #{tpu_custom_call.1} parent=1 // pred_check
      _
    $region11: #{tpu_custom_call.1} parent=1 // pred_check_branch
      %34 = sbr.rel (0) target = $region13
    $region12: #{tpu_custom_call.1} parent=1 // pred_region
      _
    $region13: #{tpu_custom_call.1} parent=1 // pred_fallthru
      _
    // Predicated region
    $region14: #{tpu_custom_call.1} parent=1 // pred_check
      _
    $region15: #{tpu_custom_call.1} parent=1 // pred_check_branch
      %36 = sbr.rel (0) target = $region17
    $region16: #{tpu_custom_call.1} parent=1 // pred_region
      %37 = dma.done [#allocation3], 128
    $region17: #{tpu_custom_call.1} parent=1 // pred_fallthru
      _
    // Predicated region
    $region18: #{tpu_custom_call.1} parent=1 // pred_check
      _
    $region19: #{tpu_custom_call.1} parent=1 // pred_check_branch
      %39 = sbr.rel (0) target = $region21
    $region20: #{tpu_custom_call.1} parent=1 // pred_region
      %40 = dma.done [#allocation6], 2048
    $region21: #{tpu_custom_call.1} parent=1 // pred_fallthru
      _
    %p41 = scmp.eq.s32.totalorder 0, 0
    // Predicated region
    $region22: #{tpu_custom_call.1} parent=1 // pred_check
      %p42 = pneg %p41
    $region23: #{tpu_custom_call.1} parent=1 // pred_check_branch
      %44 = sbr.rel (%p42) target = $region25
    $region24: #{tpu_custom_call.1} parent=1 // pred_region
      %45 = vst [vmem:[#allocation7] sm:$0xff] 0.0
    $region25: #{tpu_custom_call.1} parent=1 // pred_fallthru
      _
    %v46 = vld [vmem:[#allocation7] sm:$0xff]
    %v47 = vld [vmem:[#allocation2] sm:$0xff]
    %v48 = vld [vmem:[#allocation5] sm:$0xff]
    %v49 = vld [vmem:[#allocation5 + $0x8] sm:$0xff]
    %v50 = vld [vmem:[#allocation5 + $0x10] sm:$0xff]
    %v51 = vld [vmem:[#allocation5 + $0x18] sm:$0xff]
    %v52 = vld [vmem:[#allocation5 + $0x20] sm:$0xff]
    %v53 = vld [vmem:[#allocation5 + $0x28] sm:$0xff]
    %v54 = vld [vmem:[#allocation5 + $0x30] sm:$0xff]
    %v55 = vld [vmem:[#allocation5 + $0x38] sm:$0xff]
    %v56 = vld [vmem:[#allocation5 + $0x40] sm:$0xff]
    %v57 = vld [vmem:[#allocation5 + $0x48] sm:$0xff]
    %v58 = vld [vmem:[#allocation5 + $0x50] sm:$0xff]
    %v59 = vld [vmem:[#allocation5 + $0x58] sm:$0xff]
    %v60 = vld [vmem:[#allocation5 + $0x60] sm:$0xff]
    %v61 = vld [vmem:[#allocation5 + $0x68] sm:$0xff]
    %v62 = vld [vmem:[#allocation5 + $0x70] sm:$0xff]
    %v63 = vld [vmem:[#allocation5 + $0x78] sm:$0xff]
    %64 = vmatprep.subr.mxu0 0.0
    %65 = vmatpush1.msra.mxu0 %v48
    %66 = vmatprep.subr.mxu0 0.0
    %67 = vmatpush1.msra.mxu0 %v49
    %68 = vmatprep.subr.mxu0 0.0
    %69 = vmatpush1.msra.mxu0 %v50
    %70 = vmatprep.subr.mxu0 0.0
    %71 = vmatpush1.msra.mxu0 %v51
    %72 = vmatprep.subr.mxu0 0.0
    %73 = vmatpush1.msra.mxu0 %v52
    %74 = vmatprep.subr.mxu0 0.0
    %75 = vmatpush1.msra.mxu0 %v53
    %76 = vmatprep.subr.mxu0 0.0
    %77 = vmatpush1.msra.mxu0 %v54
    %78 = vmatprep.subr.mxu0 0.0
    %79 = vmatpush1.msra.mxu0 %v55
    %80 = vmatprep.subr.mxu0 0.0
    %81 = vmatpush1.msra.mxu0 %v56
    %82 = vmatprep.subr.mxu0 0.0
    %83 = vmatpush1.msra.mxu0 %v57
    %84 = vmatprep.subr.mxu0 0.0
    %85 = vmatpush1.msra.mxu0 %v58
    %86 = vmatprep.subr.mxu0 0.0
    %87 = vmatpush1.msra.mxu0 %v59
    %88 = vmatprep.subr.mxu0 0.0
    %89 = vmatpush1.msra.mxu0 %v60
    %90 = vmatprep.subr.mxu0 0.0
    %91 = vmatpush1.msra.mxu0 %v61
    %92 = vmatprep.subr.mxu0 0.0
    %93 = vmatpush1.msra.mxu0 %v62
    %94 = vmatprep.subr.mxu0 0.0
    %95 = vmatpush1.msra.mxu0 %v63
    %96 = vmatprep.subr.mxu0 0.0
    %97 = vmatpush1.msra.mxu0 0.0
    %98 = vmatprep.subr.mxu0 0.0
    %99 = vmatpush1.msra.mxu0 0.0
    %100 = vmatprep.subr.mxu0 0.0
    %101 = vmatpush1.msra.mxu0 0.0
    %102 = vmatprep.subr.mxu0 0.0
    %103 = vmatpush1.msra.mxu0 0.0
    %104 = vmatprep.subr.mxu0 0.0
    %105 = vmatpush1.msra.mxu0 0.0
    %106 = vmatprep.subr.mxu0 0.0
    %107 = vmatpush1.msra.mxu0 0.0
    %108 = vmatprep.subr.mxu0 0.0
    %109 = vmatpush1.msra.mxu0 0.0
    %110 = vmatprep.subr.mxu0 0.0
    %111 = vmatpush1.msra.mxu0 0.0
    %112 = vmatprep.subr.mxu0 0.0
    %113 = vmatpush1.msra.mxu0 0.0
    %114 = vmatprep.subr.mxu0 0.0
    %115 = vmatpush1.msra.mxu0 0.0
    %116 = vmatprep.subr.mxu0 0.0
    %117 = vmatpush1.msra.mxu0 0.0
    %118 = vmatprep.subr.mxu0 0.0
    %119 = vmatpush1.msra.mxu0 0.0
    %120 = vmatprep.subr.mxu0 0.0
    %121 = vmatpush1.msra.mxu0 0.0
    %122 = vmatprep.subr.mxu0 0.0
    %123 = vmatpush1.msra.mxu0 0.0
    %124 = vmatprep.subr.mxu0 0.0
    %125 = vmatpush1.msra.mxu0 0.0
    %126 = vmatprep.subr.mxu0 0.0
    %127 = vmatpush1.msra.mxu0 0.0
    %128 = vmatprep.mubr.f32.mxu0 0.0
    %129 = vmatmul.mubr.f32.gmra.mrb[0].mxu0 %v47
    %v130 = vpop.f32.mrb[0].mxu0
    %v131 = vadd.f32 0.0, %v130
    %v132 = vpop.f32.mrb[0].mxu0
    %133 = vdwg.mxu0
    %v134 = vadd.f32 %v46, %v131
    %135 = vst [vmem:[#allocation7] sm:$0xff] %v134
    // Predicated region
    $region26: #{tpu_custom_call.1} parent=1 // pred_check
      %p136 = pneg %p41
    $region27: #{tpu_custom_call.1} parent=1 // pred_check_branch
      %138 = sbr.rel (%p136) target = $region29
    $region28: #{tpu_custom_call.1} parent=1 // pred_region
      %v139 = vld [vmem:[#allocation7] sm:$0xff]
      %v140 = vld [vmem:[%s2] sm:$0x1]
      %v142 = vlaneseq
      %v143 = vshrl.u32 %v142, 7
      %v144 = vsub.s32 0, %v143
      %v145 = vrot.slane %v140, %v144
      %v147 = vadd.f32 %v139, %v145
      %v148 = vtanh.pop %v147
      %149 = vst [vmem:[#allocation7] sm:$0xff] %v148
    $region29: #{tpu_custom_call.1} parent=1 // pred_fallthru
      _
    // Predicated region
    $region30: #{tpu_custom_call.1} parent=1 // pred_check
      _
    $region31: #{tpu_custom_call.1} parent=1 // pred_check_branch
      %151 = sbr.rel (0) target = $region33
    $region32: #{tpu_custom_call.1} parent=1 // pred_region
      %s153 = ssub.s32 128, 128
      %154 = vsyncadd [#allocation4], %s153
      %s156 = sshll.u32 [#allocation7], 4
      %s157 = int_to_ptr.vmem [resolvable:$true] %s156
      %159 = dma.vmem_to_hbm [thread:$0]  %s157, 128, %s3, [#allocation4]
    $region33: #{tpu_custom_call.1} parent=1 // pred_fallthru
      _
    // Predicated region
    $region34: #{tpu_custom_call.1} parent=1 // pred_check
      _
    $region35: #{tpu_custom_call.1} parent=1 // pred_check_branch
      %161 = sbr.rel (0) target = $region37
    $region36: #{tpu_custom_call.1} parent=1 // pred_region
      %162 = dma.done [#allocation4], 128
    $region37: #{tpu_custom_call.1} parent=1 // pred_fallthru
      _
    %163 = vsyncpa [#allocation3], 1
    %164 = vsyncpa [#allocation6], 1
    %165 = vsyncpa [#allocation4], 1

</llo_original>
